<compile_context>
chip_gen: v6e
topology: v6e:2x2x1
jax: 0.10.0
libtpu: 0.0.40
codegen_flags: <defaults>
</compile_context>

<pallas_src>
import jax
import jax.numpy as jnp
from jax.experimental import pallas as pl
from jax.experimental.pallas import tpu as pltpu


def _round_up(x, m):
    return (x + m - 1) // m * m


# ----------------------------- Pallas kernel -----------------------------

def _conv_as_matmul_kernel(x_ref, w_ref, b_ref, o_ref):
    # x_ref : (TM, K_pad)      bf16  im2col patches (rows = packed (n,do,ho,wo))
    # w_ref : (K_pad, OC_pad)  bf16  resident reshaped conv weights
    # b_ref : (1, OC_pad)      f32   resident bias
    # o_ref : (TM, OC_pad)     f32   one clean write per block
    acc = jnp.dot(x_ref[...], w_ref[...], preferred_element_type=jnp.float32)
    o_ref[...] = acc + b_ref[...]


def _conv3d_s2_matmul(patches, w2d, b2d, *, TM, K_pad, OC_pad):
    M_pad = patches.shape[0]
    grid_m = M_pad // TM

    # Actual per-step VMEM footprint (double-buffered) + ~2x headroom, capped < 64 MiB (v7x).
    per_step = (TM * K_pad * 2          # input block (bf16)
                + TM * OC_pad * 4       # output block (f32)
                + K_pad * OC_pad * 2    # weights (bf16)
                + 8 * OC_pad * 4)       # bias (f32, sublane-padded)
    vmem_limit = int(min(48 * 1024 * 1024, max(4 * 1024 * 1024, 4 * per_step)))

    return pl.pallas_call(
        _conv_as_matmul_kernel,
        out_shape=jax.ShapeDtypeStruct((M_pad, OC_pad), jnp.float32),
        grid=(grid_m,),
        in_specs=[
            pl.BlockSpec((TM, K_pad), lambda m: (m, 0)),
            # constant index_map -> weights/bias stay resident across the grid
            pl.BlockSpec((K_pad, OC_pad), lambda m: (0, 0)),
            pl.BlockSpec((1, OC_pad), lambda m: (0, 0)),
        ],
        out_specs=pl.BlockSpec((TM, OC_pad), lambda m: (m, 0)),
        compiler_params=pltpu.CompilerParams(
            dimension_semantics=("parallel",),   # >=2 tiles -> both v7x TCs get work
            vmem_limit_bytes=vmem_limit,
        ),
    )(patches, w2d, b2d)


# ------------------------- TimeDistributed3d forward -------------------------

def time_distributed_3d_forward(x, weight, bias):
    """x: (B, T, C, S, H, W) f32, weight: (OC, C, 3, 3, 3), bias: (OC,)."""
    B, T, C, S, H, W = x.shape
    OC, Cw, Kd, Kh, Kw = weight.shape
    assert (Kd, Kh, Kw) == (3, 3, 3) and Cw == C
    # The module's view(B,T,OC,S/2,H/2,W/2) only matches Conv3d(k=3,s=2,p=1) output
    # size ((d+2-3)//2 + 1) when the spatial dims are even.
    assert S % 2 == 0 and H % 2 == 0 and W % 2 == 0, "even spatial dims required"
    N = B * T
    Do, Ho, Wo = S // 2, H // 2, W // 2

    K = 27 * C
    K_pad = _round_up(K, 128)          # lane-dense LHS + full MXU contraction depth
    OC_pad = _round_up(OC, 128)        # lane-dense output (unmasked stores)
    M_total = N * Do * Ho * Wo

    # Tile M: target 256, but keep >= 2 grid tiles (v7x has 2 TensorCores).
    if M_total >= 512:
        TM = 256
    else:
        TM = max(8, _round_up((M_total + 1) // 2, 8))
    grid_m = pl.cdiv(M_total, TM)
    M_pad = grid_m * TM

    # ---- glue: pad + channels-last, then stride-2 im2col straight into (M, 27*C).
    # The 27-tap stack lands with (tap, c) already innermost, so no further transpose
    # of the (~3.4x duplicated) patch tensor is required.
    x_cl = jnp.transpose(x.reshape(N, C, S, H, W), (0, 2, 3, 4, 1)).astype(jnp.bfloat16)
    x_pad = jnp.pad(x_cl, ((0, 0), (1, 1), (1, 1), (1, 1), (0, 0)))  # (N,S+2,H+2,W+2,C)
    taps = []
    for kd in range(3):
        for kh in range(3):
            for kw in range(3):
                taps.append(x_pad[:, kd:kd + 2 * Do:2,
                                  kh:kh + 2 * Ho:2,
                                  kw:kw + 2 * Wo:2, :])          # (N,Do,Ho,Wo,C)
    patches = jnp.stack(taps, axis=-2)                            # (N,Do,Ho,Wo,27,C)
    patches = patches.reshape(M_total, K)
    patches = jnp.pad(patches, ((0, M_pad - M_total), (0, K_pad - K)))

    # weight -> ((kd,kh,kw,c), OC_pad) bf16 ; bias -> (1, OC_pad) f32
    w2d = jnp.transpose(weight, (2, 3, 4, 1, 0)).reshape(K, OC)
    w2d = jnp.pad(w2d, ((0, K_pad - K), (0, OC_pad - OC))).astype(jnp.bfloat16)
    b2d = jnp.pad(bias.astype(jnp.float32).reshape(1, OC), ((0, 0), (0, OC_pad - OC)))

    # ---- hot path: one big MXU matmul per grid step
    out_pad = _conv3d_s2_matmul(patches, w2d, b2d, TM=TM, K_pad=K_pad, OC_pad=OC_pad)

    # ---- glue: strip padding, restore torch channel-first layout, squeeze like torch
    out = out_pad[:M_total, :OC].reshape(N, Do, Ho, Wo, OC)
    out = jnp.transpose(out, (0, 4, 1, 2, 3))                     # (N, OC, Do, Ho, Wo)
    out = out.reshape(B, T, OC, Do, Ho, Wo)
    # NOTE: torch's .squeeze() (no axis) also drops B==1 / T==1 / OC==1 dims; mirrored here.
    return jnp.squeeze(out)


# ----------------------------------- main -----------------------------------

if __name__ == "__main__":
    key = jax.random.PRNGKey(0)
    k_x, k_w, k_b = jax.random.split(key, 3)

    # Small shapes consistent with the forward: (B, T, C, S, H, W)
    B, T, C, S, H, W = 2, 3, 4, 8, 8, 8
    OC, K = 8, 3

    x = jax.random.normal(k_x, (B, T, C, S, H, W), dtype=jnp.float32)
    weight = jax.random.normal(k_w, (OC, C, K, K, K), dtype=jnp.float32) * 0.1
    bias = jax.random.normal(k_b, (OC,), dtype=jnp.float32) * 0.1

    fwd = jax.jit(time_distributed_3d_forward)   # lets XLA fuse the wrapper glue
    out = jax.block_until_ready(fwd(x, weight, bias))

    # Reference: per-time-step Conv3d with the same bf16 inputs / f32 accumulation.
    x_bf = x.astype(jnp.bfloat16).reshape(B * T, C, S, H, W)
    w_bf = weight.astype(jnp.bfloat16)
    ref = jax.lax.conv_general_dilated(
        x_bf, w_bf, window_strides=(2, 2, 2), padding=[(1, 1)] * 3,
        dimension_numbers=("NCDHW", "OIDHW", "NCDHW"),
        preferred_element_type=jnp.float32)
    ref = ref + bias.reshape(1, OC, 1, 1, 1)
    ref = jnp.squeeze(ref.reshape(B, T, OC, S // 2, H // 2, W // 2))

    assert out.shape == ref.shape, (out.shape, ref.shape)
    assert jnp.allclose(out, ref, rtol=1e-2, atol=1e-2), float(jnp.max(jnp.abs(out - ref)))

    print("KERNEL_OK")
</pallas_src>

<mosaic_0001>
module attributes {stable_mosaic.version = 11 : i64} {
  func.func @_conv_as_matmul_kernel(%arg0: i32, %arg1: memref<192x128xbf16, #tpu.memory_space<vmem>>, %arg2: memref<128x128xbf16, #tpu.memory_space<vmem>>, %arg3: memref<1x128xf32, #tpu.memory_space<vmem>>, %arg4: memref<192x128xf32, #tpu.memory_space<vmem>>) attributes {dimension_semantics = [#tpu.dimension_semantics<parallel>], iteration_bounds = array<i64: 2>, scalar_prefetch = 0 : i64, scratch_operands = 0 : i64, tpu.core_type = #tpu.core_type<tc>, window_params = [{transform_indices = @transform_0, window_bounds = array<i64: 192, 128>}, {pipeline_mode = #tpu.pipeline_mode<synchronous>, transform_indices = @transform_1, window_bounds = array<i64: 128, 128>}, {pipeline_mode = #tpu.pipeline_mode<synchronous>, transform_indices = @transform_2, window_bounds = array<i64: 1, 128>}, {transform_indices = @transform_3, window_bounds = array<i64: 192, 128>}]} {
    %c0 = arith.constant 0 : index
    %c0_0 = arith.constant 0 : index
    %0 = vector.load %arg1[%c0, %c0_0] : memref<192x128xbf16, #tpu.memory_space<vmem>>, vector<192x128xbf16>
    %c0_1 = arith.constant 0 : index
    %c0_2 = arith.constant 0 : index
    %1 = vector.load %arg2[%c0_1, %c0_2] : memref<128x128xbf16, #tpu.memory_space<vmem>>, vector<128x128xbf16>
    %cst = arith.constant dense<0.000000e+00> : vector<192x128xf32>
    %2 = tpu.matmul %0, %1, %cst {dimension_numbers = #tpu.dot_dimension_numbers<[1], [0], [0], [1], [0, 0, 1, 1], [], []>} : vector<192x128xbf16>, vector<128x128xbf16>, vector<192x128xf32> -> vector<192x128xf32>
    %c0_3 = arith.constant 0 : index
    %c0_4 = arith.constant 0 : index
    %3 = vector.load %arg3[%c0_3, %c0_4] : memref<1x128xf32, #tpu.memory_space<vmem>>, vector<1x128xf32>
    %4 = vector.broadcast %3 : vector<1x128xf32> to vector<192x128xf32>
    %5 = arith.addf %2, %4 : vector<192x128xf32>
    %c0_5 = arith.constant 0 : index
    %c0_6 = arith.constant 0 : index
    %6 = vector.load %arg4[%c0_5, %c0_6] : memref<192x128xf32, #tpu.memory_space<vmem>>, vector<192x128xf32>
    tpu.vector_store %arg4[%c0_5, %c0_6], %5 {strides = array<i32>} : memref<192x128xf32, #tpu.memory_space<vmem>>, vector<192x128xf32>,
    return
  }
  func.func @transform_0(%arg0: i32) -> (i32, i32) {
    %c0_i32 = arith.constant 0 : i32
    %c0_i32_0 = arith.constant 0 : i32
    return %arg0, %c0_i32 : i32, i32
  }
  func.func @transform_1(%arg0: i32) -> (i32, i32) {
    %c0_i32 = arith.constant 0 : i32
    %c0_i32_0 = arith.constant 0 : i32
    %c0_i32_1 = arith.constant 0 : i32
    return %c0_i32, %c0_i32_0 : i32, i32
  }
  func.func @transform_2(%arg0: i32) -> (i32, i32) {
    %c0_i32 = arith.constant 0 : i32
    %c0_i32_0 = arith.constant 0 : i32
    %c0_i32_1 = arith.constant 0 : i32
    return %c0_i32, %c0_i32_0 : i32, i32
  }
  func.func @transform_3(%arg0: i32) -> (i32, i32) {
    %c0_i32 = arith.constant 0 : i32
    %c0_i32_0 = arith.constant 0 : i32
    return %arg0, %c0_i32 : i32, i32
  }
}

</mosaic_0001>

<llo_original>
// kernel: time_distributed_3d_forward.1
$region0: #{time_distributed_3d_forward.1}
  #allocation0 [shape = 'u32[]', space=smem, size = 0x4, offset = 0x4, fixed_abs, tag = 'smem constant byte address 0x4 - core index']
  #allocation1 [shape = 'u32[144,128]{1,0:T(1,128)}', space=vmem, size = 0x12000, scoped, tag = 'internal scratch']
  %s0 = inlined_call_operand.vmem [shape: bf16[384,128], index: 0, kind: input, shape index: {}]
  %s1 = inlined_call_operand.vmem [shape: bf16[128,128], index: 1, kind: input, shape index: {}]
  %s2 = inlined_call_operand.vmem [shape: f32[1,128], index: 2, kind: input, shape index: {}]
  %s3 = inlined_call_operand.hbm [shape: f32[384,128], index: 3, kind: output, shape index: {}]
  %s4 = sld [smem:[#allocation0]]
  $region45: #{time_distributed_3d_forward.1} parent=0
    _
  %s6 = ssub.s32 1, %s4
  %s7 = scalar_select 0, %s6, %s4
  $region1: #{time_distributed_3d_forward.1} parent=0
    #allocation2 [shape = 'u8[196608]{0}', space=vmem, size = 0x30000, scoped, tag = 'output window, operand 0']
    #allocation3 [shape = 's32[2]{0}', space=sflag, size = 0x8, scoped, tag = 'scoped memory for time_distributed_3d_forward.1']
    %8 = vsyncpa [#allocation3], 0
    %s9 = scalar_lea.sflag [#allocation3], 1
    %10 = vsyncpa %s9, 0
    loop: start=0, step=1, limit=4
    $region2: #{time_distributed_3d_forward.1} parent=1 // loop_pre_header
      _
    $region3: #{time_distributed_3d_forward.1} parent=1 // loop_header
      %s12 = sphi 0, %s16
      %p13 = scmp.ge.s32.totalorder %s12, 4
      %s22 = sphi 0, %s24
      %s25 = sphi 0, %s22
      %s26 = sphi 0, %s25
      %s42 = sphi 0, %s26
      %s46 = sphi 0, %s46
      %s48 = sphi 0, %s46
      %s49 = sphi 0, %s48
      %s63 = sphi 0, %s49
      %s67 = sphi 0, %s67
      %s69 = sphi 0, %s67
      %s70 = sphi 0, %s69
      %s84 = sphi 0, %s70
      %s90 = sphi 0, %s92
      %s93 = sphi 0, %s90
      %s94 = sphi 0, %s93
      %s110 = sphi 0, %s94
    $region4: #{time_distributed_3d_forward.1} parent=1 // loop_header_branch
      %15 = sbr.rel (%p13) target = $region8
    $region5: #{time_distributed_3d_forward.1} parent=1 // loop_body
      %s17 = ssub.s32 %s12, 1
      %s18 = ssub.s32 %s12, 2
      %s19 = sadd.s32 %s12, 1
      %s20 = ssub.s32 %s12, %s19
      %p21 = scmp.eq.s32.totalorder %s20, 0
      %s23 = sadd.s32 %s22, 1
      %s24 = scalar_select %p21, %s22, %s23
      %p27 = pneg %p21
      %p28 = scmp.eq.s32.totalorder %s12, 1
      %p29 = por %p27, %p28
      %p30 = scmp.ne.s32.totalorder %s22, %s25
      %p31 = scmp.eq.s32.totalorder %s12, 0
      %p32 = por %p30, %p31
      %p33 = scmp.ne.s32.totalorder %s22, %s25
      %p34 = scmp.eq.s32.totalorder %s17, 1
      %p35 = por %p33, %p34
      %p36 = scmp.ne.s32.totalorder %s25, %s26
      %p37 = scmp.eq.s32.totalorder %s17, 0
      %p38 = por %p36, %p37
      %p39 = scmp.ne.s32.totalorder %s25, %s26
      %p40 = scmp.eq.s32.totalorder %s18, 1
      %p41 = por %p39, %p40
      %p43 = scmp.ne.s32.totalorder %s26, %s42
      %p44 = scmp.eq.s32.totalorder %s18, 0
      %p45 = por %p43, %p44
      %s47 = sadd.s32 %s46, 1
      %p50 = scmp.eq.s32.totalorder %s12, 1
      %p51 = scmp.ne.s32.totalorder %s46, %s48
      %p52 = scmp.eq.s32.totalorder %s12, 0
      %p53 = por %p51, %p52
      %p54 = scmp.ne.s32.totalorder %s46, %s48
      %p55 = scmp.eq.s32.totalorder %s17, 1
      %p56 = por %p54, %p55
      %p57 = scmp.ne.s32.totalorder %s48, %s49
      %p58 = scmp.eq.s32.totalorder %s17, 0
      %p59 = por %p57, %p58
      %p60 = scmp.ne.s32.totalorder %s48, %s49
      %p61 = scmp.eq.s32.totalorder %s18, 1
      %p62 = por %p60, %p61
      %p64 = scmp.ne.s32.totalorder %s49, %s63
      %p65 = scmp.eq.s32.totalorder %s18, 0
      %p66 = por %p64, %p65
      %s68 = sadd.s32 %s67, 1
      %p71 = scmp.eq.s32.totalorder %s12, 1
      %p72 = scmp.ne.s32.totalorder %s67, %s69
      %p73 = scmp.eq.s32.totalorder %s12, 0
      %p74 = por %p72, %p73
      %p75 = scmp.ne.s32.totalorder %s67, %s69
      %p76 = scmp.eq.s32.totalorder %s17, 1
      %p77 = por %p75, %p76
      %p78 = scmp.ne.s32.totalorder %s69, %s70
      %p79 = scmp.eq.s32.totalorder %s17, 0
      %p80 = por %p78, %p79
      %p81 = scmp.ne.s32.totalorder %s69, %s70
      %p82 = scmp.eq.s32.totalorder %s18, 1
      %p83 = por %p81, %p82
      %p85 = scmp.ne.s32.totalorder %s70, %s84
      %p86 = scmp.eq.s32.totalorder %s18, 0
      %p87 = por %p85, %p86
      %s88 = ssub.s32 %s12, %s19
      %p89 = scmp.eq.s32.totalorder %s88, 0
      %s91 = sadd.s32 %s90, 1
      %s92 = scalar_select %p89, %s90, %s91
      %p95 = pneg %p89
      %p96 = scmp.eq.s32.totalorder %s12, 1
      %p97 = por %p95, %p96
      %p98 = scmp.ne.s32.totalorder %s90, %s93
      %p99 = scmp.eq.s32.totalorder %s12, 0
      %p100 = por %p98, %p99
      %p101 = scmp.ne.s32.totalorder %s90, %s93
      %p102 = scmp.eq.s32.totalorder %s17, 1
      %p103 = por %p101, %p102
      %p104 = scmp.ne.s32.totalorder %s93, %s94
      %p105 = scmp.eq.s32.totalorder %s17, 0
      %p106 = por %p104, %p105
      %p107 = scmp.ne.s32.totalorder %s93, %s94
      %p108 = scmp.eq.s32.totalorder %s18, 1
      %p109 = por %p107, %p108
      %p111 = scmp.ne.s32.totalorder %s94, %s110
      %p112 = scmp.eq.s32.totalorder %s18, 0
      %p113 = por %p111, %p112
      %p114 = scmp.le.s32.totalorder 1, %s12
      %p115 = scmp.lt.s32.totalorder %s12, 3
      %p116 = pnand %p114, %p115
      %p117 = pneg %p116
      // Predicated region
      $region9: #{time_distributed_3d_forward.1} parent=5 // pred_check
        _
      $region10: #{time_distributed_3d_forward.1} parent=5 // pred_check_branch
        %119 = sbr.rel (%p116) target = $region12
      $region11: #{time_distributed_3d_forward.1} parent=5 // pred_region
        %s120 = ssub.s32 %s12, 1
        // Predicated region
        $region13: #{time_distributed_3d_forward.1} parent=11 // pred_check
          %p121 = pneg %p59
        $region14: #{time_distributed_3d_forward.1} parent=11 // pred_check_branch
          %123 = sbr.rel (%p121) target = $region16
        $region15: #{time_distributed_3d_forward.1} parent=11 // pred_region
          _
        $region16: #{time_distributed_3d_forward.1} parent=11 // pred_fallthru
          _
        // Predicated region
        $region17: #{time_distributed_3d_forward.1} parent=11 // pred_check
          %p124 = pneg %p80
        $region18: #{time_distributed_3d_forward.1} parent=11 // pred_check_branch
          %126 = sbr.rel (%p124) target = $region20
        $region19: #{time_distributed_3d_forward.1} parent=11 // pred_region
          _
        $region20: #{time_distributed_3d_forward.1} parent=11 // pred_fallthru
          _
      $region12: #{time_distributed_3d_forward.1} parent=5 // pred_fallthru
        _
      %p127 = scmp.lt.s32.totalorder %s12, 2
      // Predicated region
      $region21: #{time_distributed_3d_forward.1} parent=5 // pred_check
        %p128 = pneg %p127
      $region22: #{time_distributed_3d_forward.1} parent=5 // pred_check_branch
        %130 = sbr.rel (%p128) target = $region24
      $region23: #{time_distributed_3d_forward.1} parent=5 // pred_region
        // Predicated region
        $region25: #{time_distributed_3d_forward.1} parent=23 // pred_check
          %p131 = pneg %p32
        $region26: #{time_distributed_3d_forward.1} parent=23 // pred_check_branch
          %133 = sbr.rel (%p131) target = $region28
        $region27: #{time_distributed_3d_forward.1} parent=23 // pred_region
          %s134 = smul.u32 24, %s12
          %p135 = scmp.lt.s32.totalorder %s134, 47
          %s136 = scalar_select %p135, %s134, 47
          %s137 = smul.addr %s136, 4
          %s138 = scalar_lea.vmem %s0, %s137
          %s139 = smul.u32 24, %s12
        $region28: #{time_distributed_3d_forward.1} parent=23 // pred_fallthru
          _
      $region24: #{time_distributed_3d_forward.1} parent=5 // pred_fallthru
        _
      %p140 = scmp.le.s32.totalorder 1, %s12
      %p141 = scmp.lt.s32.totalorder %s12, 3
      %p142 = pnand %p140, %p141
      %p143 = pneg %p142
      // Predicated region
      $region29: #{time_distributed_3d_forward.1} parent=5 // pred_check
        _
      $region30: #{time_distributed_3d_forward.1} parent=5 // pred_check_branch
        %145 = sbr.rel (%p142) target = $region32
      $region31: #{time_distributed_3d_forward.1} parent=5 // pred_region
        %s146 = ssub.s32 %s12, 1
        %s147 = smul.u32 24, %s17
        %p148 = scmp.lt.s32.totalorder %s147, 47
        %s149 = scalar_select %p148, %s147, 47
        %s150 = smul.addr %s149, 4
        %s151 = scalar_lea.vmem %s0, %s150
        %p152 = pneg %p38
        %p153 = pneg %p35
        %p154 = pneg %p59
        %p155 = pneg %p56
        %p156 = pneg %p80
        %p157 = pneg %p77
        %p158 = pneg %p106
        %p159 = pneg %p103
        %s160 = sand.u32 %s93, 1
        %s161 = scalar_lea.sflag [#allocation3], %s160
        %s162 = sand.u32 %s93, 1
        %s163 = smul.addr %s162, 192
        %s164 = scalar_lea.vmem [#allocation2], %s163
        %s165 = smul.u32 24, %s17
        %p166 = scmp.lt.s32.totalorder %s165, 47
        %s167 = scalar_select %p166, %s165, 47
        %s168 = smul.addr %s167, 4
        %s169 = scalar_lea.vmem %s0, %s168
        %s170 = smul.u32 24, %s17
        %s171 = smul.u32 24, %s17
        %v173 = vld [vmem:[%s169] sm:$0xf]
        %v174 = vld [vmem:[%s169 + $0x4] sm:$0xf]
        %v175 = vld [vmem:[%s169 + $0x8] sm:$0xf]
        %v176 = vld [vmem:[%s169 + $0xc] sm:$0xf]
        %v177 = vld [vmem:[%s169 + $0x10] sm:$0xf]
        %v178 = vld [vmem:[%s169 + $0x14] sm:$0xf]
        %v179 = vld [vmem:[%s169 + $0x18] sm:$0xf]
        %v180 = vld [vmem:[%s169 + $0x1c] sm:$0xf]
        %v181 = vld [vmem:[%s169 + $0x20] sm:$0xf]
        %v182 = vld [vmem:[%s169 + $0x24] sm:$0xf]
        %v183 = vld [vmem:[%s169 + $0x28] sm:$0xf]
        %v184 = vld [vmem:[%s169 + $0x2c] sm:$0xf]
        %v185 = vld [vmem:[%s169 + $0x30] sm:$0xf]
        %v186 = vld [vmem:[%s169 + $0x34] sm:$0xf]
        %v187 = vld [vmem:[%s169 + $0x38] sm:$0xf]
        %v188 = vld [vmem:[%s169 + $0x3c] sm:$0xf]
        %v189 = vld [vmem:[%s169 + $0x40] sm:$0xf]
        %v190 = vld [vmem:[%s169 + $0x44] sm:$0xf]
        %v191 = vld [vmem:[%s169 + $0x48] sm:$0xf]
        %v192 = vld [vmem:[%s169 + $0x4c] sm:$0xf]
        %v193 = vld [vmem:[%s169 + $0x50] sm:$0xf]
        %v194 = vld [vmem:[%s169 + $0x54] sm:$0xf]
        %v195 = vld [vmem:[%s169 + $0x58] sm:$0xf]
        %v196 = vld [vmem:[%s169 + $0x5c] sm:$0xf]
        %v197 = vld [vmem:[%s1] sm:$0xf]
        %v198 = vld [vmem:[%s1 + $0x4] sm:$0xf]
        %v199 = vld [vmem:[%s1 + $0x8] sm:$0xf]
        %v200 = vld [vmem:[%s1 + $0xc] sm:$0xf]
        %v201 = vld [vmem:[%s1 + $0x10] sm:$0xf]
        %v202 = vld [vmem:[%s1 + $0x14] sm:$0xf]
        %v203 = vld [vmem:[%s1 + $0x18] sm:$0xf]
        %v204 = vld [vmem:[%s1 + $0x1c] sm:$0xf]
        %v205 = vld [vmem:[%s1 + $0x20] sm:$0xf]
        %v206 = vld [vmem:[%s1 + $0x24] sm:$0xf]
        %v207 = vld [vmem:[%s1 + $0x28] sm:$0xf]
        %v208 = vld [vmem:[%s1 + $0x2c] sm:$0xf]
        %v209 = vld [vmem:[%s1 + $0x30] sm:$0xf]
        %v210 = vld [vmem:[%s1 + $0x34] sm:$0xf]
        %v211 = vld [vmem:[%s1 + $0x38] sm:$0xf]
        %v212 = vld [vmem:[%s1 + $0x3c] sm:$0xf]
        %v213 = vld [vmem:[%s2] sm:$0x1]
        %v215 = vlaneseq
        %v216 = vshrl.u32 %v215, 7
        %v217 = vsub.s32 0, %v216
        %v218 = vrot.slane %v213, %v217
        %v244 = vunpack.c.l.b16 %v173
        %v245 = vunpack.c.l.b16 %v174
        %v246 = vunpack.c.l.b16 %v175
        %v247 = vunpack.c.l.b16 %v176
        %v248 = vunpack.c.l.b16 %v177
        %v249 = vunpack.c.l.b16 %v178
        %v250 = vunpack.c.l.b16 %v179
        %v251 = vunpack.c.l.b16 %v180
        %v252 = vunpack.c.l.b16 %v181
        %v253 = vunpack.c.l.b16 %v182
        %v254 = vunpack.c.l.b16 %v183
        %v255 = vunpack.c.l.b16 %v184
        %v256 = vunpack.c.l.b16 %v185
        %v257 = vunpack.c.l.b16 %v186
        %v258 = vunpack.c.l.b16 %v187
        %v259 = vunpack.c.l.b16 %v188
        %v260 = vunpack.c.l.b16 %v189
        %v261 = vunpack.c.l.b16 %v190
        %v262 = vunpack.c.l.b16 %v191
        %v263 = vunpack.c.l.b16 %v192
        %v264 = vunpack.c.l.b16 %v193
        %v265 = vunpack.c.l.b16 %v194
        %v266 = vunpack.c.l.b16 %v195
        %v267 = vunpack.c.l.b16 %v196
        %v268 = vpack.c.b16 %v245, %v244
        %v269 = vpack.c.b16 %v247, %v246
        %v270 = vpack.c.b16 %v249, %v248
        %v271 = vpack.c.b16 %v251, %v250
        %v272 = vpack.c.b16 %v253, %v252
        %v273 = vpack.c.b16 %v255, %v254
        %v274 = vpack.c.b16 %v257, %v256
        %v275 = vpack.c.b16 %v259, %v258
        %v276 = vpack.c.b16 %v261, %v260
        %v277 = vpack.c.b16 %v263, %v262
        %v278 = vpack.c.b16 %v265, %v264
        %v279 = vpack.c.b16 %v267, %v266
        %v308 = vunpack.c.l.b16 %v197
        %v309 = vunpack.c.l.b16 %v198
        %v310 = vunpack.c.l.b16 %v199
        %v311 = vunpack.c.l.b16 %v200
        %v312 = vunpack.c.l.b16 %v201
        %v313 = vunpack.c.l.b16 %v202
        %v314 = vunpack.c.l.b16 %v203
        %v315 = vunpack.c.l.b16 %v204
        %v316 = vunpack.c.l.b16 %v205
        %v317 = vunpack.c.l.b16 %v206
        %v318 = vunpack.c.l.b16 %v207
        %v319 = vunpack.c.l.b16 %v208
        %v320 = vunpack.c.l.b16 %v209
        %v321 = vunpack.c.l.b16 %v210
        %v322 = vunpack.c.l.b16 %v211
        %v323 = vunpack.c.l.b16 %v212
        %v324 = vpack.c.b16 %v309, %v308
        %v325 = vpack.c.b16 %v311, %v310
        %v326 = vpack.c.b16 %v313, %v312
        %v327 = vpack.c.b16 %v315, %v314
        %v328 = vpack.c.b16 %v317, %v316
        %v329 = vpack.c.b16 %v319, %v318
        %v330 = vpack.c.b16 %v321, %v320
        %v331 = vpack.c.b16 %v323, %v322
        %340 = vmatprep.subr.bf16.mxu0 0
        %341 = vmatpush1.bf16.msra.mxu0 %v331
        %342 = vmatprep.subr.bf16.mxu0 0
        %343 = vmatpush1.bf16.msra.mxu0 %v330
        %344 = vmatprep.subr.bf16.mxu0 0
        %345 = vmatpush1.bf16.msra.mxu0 %v329
        %346 = vmatprep.subr.bf16.mxu0 0
        %347 = vmatpush1.bf16.msra.mxu0 %v328
        %348 = vmatprep.subr.bf16.mxu0 0
        %349 = vmatpush1.bf16.msra.mxu0 %v327
        %350 = vmatprep.subr.bf16.mxu0 0
        %351 = vmatpush1.bf16.msra.mxu0 %v326
        %352 = vmatprep.subr.bf16.mxu0 0
        %353 = vmatpush1.bf16.msra.mxu0 %v325
        %354 = vmatprep.subr.bf16.mxu0 0
        %355 = vmatpush1.bf16.msra.mxu0 %v324
        %356 = vmatprep.subr.bf16.mxu0 0
        %357 = vmatpush2.bf16.msra.mxu0 0
        %358 = vmatprep.subr.bf16.mxu0 0
        %359 = vmatpush2.bf16.msra.mxu0 0
        %360 = vmatprep.subr.bf16.mxu0 0
        %361 = vmatpush2.bf16.msra.mxu0 0
        %362 = vmatprep.subr.bf16.mxu0 0
        %363 = vmatpush2.bf16.msra.mxu0 0
        %364 = vmatprep.subr.bf16.mxu0 0
        %365 = vmatpush2.bf16.msra.mxu0 0
        %366 = vmatprep.subr.bf16.mxu0 0
        %367 = vmatpush2.bf16.msra.mxu0 0
        %368 = vmatprep.subr.bf16.mxu0 0
        %369 = vmatpush2.bf16.msra.mxu0 0
        %370 = vmatprep.subr.bf16.mxu0 0
        %371 = vmatpush2.bf16.msra.mxu0 0
        %372 = vmatprep.mubr.bf16.mxu0 0
        %373 = vmatmul.mubr.bf16.gmra.mxu0 %v268
        %v374 = vpop.f32.mrf.mxu0
        %v375 = vadd.f32 %v218, %v374
        %v376 = vpop.f32.mrf.mxu0
        %v377 = vpop.f32.mrf.mxu0
        %v378 = vadd.f32 %v218, %v377
        %v379 = vpop.f32.mrf.mxu0
        %380 = vmatprep.mubr.bf16.mxu0 0
        %381 = vmatmul.mubr.bf16.gmra.mxu0 %v269
        %v382 = vpop.f32.mrf.mxu0
        %v383 = vadd.f32 %v218, %v382
        %v384 = vpop.f32.mrf.mxu0
        %v385 = vpop.f32.mrf.mxu0
        %v386 = vadd.f32 %v218, %v385
        %v387 = vpop.f32.mrf.mxu0
        %388 = vmatprep.mubr.bf16.mxu0 0
        %389 = vmatmul.mubr.bf16.gmra.mxu0 %v270
        %v390 = vpop.f32.mrf.mxu0
        %v391 = vadd.f32 %v218, %v390
        %v392 = vpop.f32.mrf.mxu0
        %v393 = vpop.f32.mrf.mxu0
        %v394 = vadd.f32 %v218, %v393
        %v395 = vpop.f32.mrf.mxu0
        %396 = vmatprep.mubr.bf16.mxu0 0
        %397 = vmatmul.mubr.bf16.gmra.mxu0 %v271
        %v398 = vpop.f32.mrf.mxu0
        %v399 = vadd.f32 %v218, %v398
        %v400 = vpop.f32.mrf.mxu0
        %v401 = vpop.f32.mrf.mxu0
        %v402 = vadd.f32 %v218, %v401
        %v403 = vpop.f32.mrf.mxu0
        %404 = vmatprep.mubr.bf16.mxu0 0
        %405 = vmatmul.mubr.bf16.gmra.mxu0 %v272
        %v406 = vpop.f32.mrf.mxu0
        %v407 = vadd.f32 %v218, %v406
        %v408 = vpop.f32.mrf.mxu0
        %v409 = vpop.f32.mrf.mxu0
        %v410 = vadd.f32 %v218, %v409
        %v411 = vpop.f32.mrf.mxu0
        %412 = vmatprep.mubr.bf16.mxu0 0
        %413 = vmatmul.mubr.bf16.gmra.mxu0 %v273
        %v414 = vpop.f32.mrf.mxu0
        %v415 = vadd.f32 %v218, %v414
        %v416 = vpop.f32.mrf.mxu0
        %v417 = vpop.f32.mrf.mxu0
        %v418 = vadd.f32 %v218, %v417
        %v419 = vpop.f32.mrf.mxu0
        %420 = vmatprep.mubr.bf16.mxu0 0
        %421 = vmatmul.mubr.bf16.gmra.mxu0 %v274
        %v422 = vpop.f32.mrf.mxu0
        %v423 = vadd.f32 %v218, %v422
        %v424 = vpop.f32.mrf.mxu0
        %v425 = vpop.f32.mrf.mxu0
        %v426 = vadd.f32 %v218, %v425
        %v427 = vpop.f32.mrf.mxu0
        %428 = vmatprep.mubr.bf16.mxu0 0
        %429 = vmatmul.mubr.bf16.gmra.mxu0 %v275
        %v430 = vpop.f32.mrf.mxu0
        %v431 = vadd.f32 %v218, %v430
        %v432 = vpop.f32.mrf.mxu0
        %v433 = vpop.f32.mrf.mxu0
        %v434 = vadd.f32 %v218, %v433
        %v435 = vpop.f32.mrf.mxu0
        %436 = vmatprep.mubr.bf16.mxu0 0
        %437 = vmatmul.mubr.bf16.gmra.mxu0 %v276
        %v438 = vpop.f32.mrf.mxu0
        %v439 = vadd.f32 %v218, %v438
        %v440 = vpop.f32.mrf.mxu0
        %v441 = vpop.f32.mrf.mxu0
        %v442 = vadd.f32 %v218, %v441
        %v443 = vpop.f32.mrf.mxu0
        %444 = vmatprep.mubr.bf16.mxu0 0
        %445 = vmatmul.mubr.bf16.gmra.mxu0 %v277
        %v446 = vpop.f32.mrf.mxu0
        %v447 = vadd.f32 %v218, %v446
        %v448 = vpop.f32.mrf.mxu0
        %v449 = vpop.f32.mrf.mxu0
        %v450 = vadd.f32 %v218, %v449
        %v451 = vpop.f32.mrf.mxu0
        %452 = vmatprep.mubr.bf16.mxu0 0
        %453 = vmatmul.mubr.bf16.gmra.mxu0 %v278
        %v454 = vpop.f32.mrf.mxu0
        %v455 = vadd.f32 %v218, %v454
        %v456 = vpop.f32.mrf.mxu0
        %v457 = vpop.f32.mrf.mxu0
        %v458 = vadd.f32 %v218, %v457
        %v459 = vpop.f32.mrf.mxu0
        %460 = vmatprep.mubr.bf16.mxu0 0
        %461 = vmatmul.mubr.bf16.gmra.mxu0 %v279
        %v462 = vpop.f32.mrf.mxu0
        %v463 = vadd.f32 %v218, %v462
        %v464 = vpop.f32.mrf.mxu0
        %v465 = vpop.f32.mrf.mxu0
        %v466 = vadd.f32 %v218, %v465
        %v467 = vpop.f32.mrf.mxu0
        %468 = vdwg.mxu0
        %469 = vst [vmem:[%s164] sm:$0xff] %v375
        %470 = vst [vmem:[%s164 + $0x8] sm:$0xff] %v378
        %471 = vst [vmem:[%s164 + $0x10] sm:$0xff] %v383
        %472 = vst [vmem:[%s164 + $0x18] sm:$0xff] %v386
        %473 = vst [vmem:[%s164 + $0x20] sm:$0xff] %v391
        %474 = vst [vmem:[%s164 + $0x28] sm:$0xff] %v394
        %475 = vst [vmem:[%s164 + $0x30] sm:$0xff] %v399
        %476 = vst [vmem:[%s164 + $0x38] sm:$0xff] %v402
        %477 = vst [vmem:[%s164 + $0x40] sm:$0xff] %v407
        %478 = vst [vmem:[%s164 + $0x48] sm:$0xff] %v410
        %479 = vst [vmem:[%s164 + $0x50] sm:$0xff] %v415
        %480 = vst [vmem:[%s164 + $0x58] sm:$0xff] %v418
        %481 = vst [vmem:[%s164 + $0x60] sm:$0xff] %v423
        %482 = vst [vmem:[%s164 + $0x68] sm:$0xff] %v426
        %483 = vst [vmem:[%s164 + $0x70] sm:$0xff] %v431
        %484 = vst [vmem:[%s164 + $0x78] sm:$0xff] %v434
        %485 = vst [vmem:[%s164 + $0x80] sm:$0xff] %v439
        %486 = vst [vmem:[%s164 + $0x88] sm:$0xff] %v442
        %487 = vst [vmem:[%s164 + $0x90] sm:$0xff] %v447
        %488 = vst [vmem:[%s164 + $0x98] sm:$0xff] %v450
        %489 = vst [vmem:[%s164 + $0xa0] sm:$0xff] %v455
        %490 = vst [vmem:[%s164 + $0xa8] sm:$0xff] %v458
        %491 = vst [vmem:[%s164 + $0xb0] sm:$0xff] %v463
        %492 = vst [vmem:[%s164 + $0xb8] sm:$0xff] %v466
        %s493 = sand.u32 %s93, 1
        %s494 = scalar_lea.sflag [#allocation3], %s493
        %s495 = sand.u32 %s93, 1
        %s496 = smul.addr %s495, 192
        %s497 = scalar_lea.vmem [#allocation2], %s496
        // Predicated region
        $region33: #{time_distributed_3d_forward.1} parent=31 // pred_check
          %p498 = pneg %p103
        $region34: #{time_distributed_3d_forward.1} parent=31 // pred_check_branch
          %500 = sbr.rel (%p498) target = $region36
        $region35: #{time_distributed_3d_forward.1} parent=31 // pred_region
          %s501 = smul.u32 24, %s17
          %s503 = ssub.s32 3072, 3072
          %504 = vsyncadd %s494, %s503
          %s505 = smul.addr %s501, 128
          %s506 = scalar_lea.hbm %s3, %s505
          %s507 = sshll.u32 %s497, 4
          %s508 = int_to_ptr.vmem [resolvable:$true] %s507
          %513 = dma.vmem_to_hbm [thread:$0]  %s508, 3072, %s506, %s494, 128, 128, 8
        $region36: #{time_distributed_3d_forward.1} parent=31 // pred_fallthru
          _
      $region32: #{time_distributed_3d_forward.1} parent=5 // pred_fallthru
        _
      %p514 = scmp.le.s32.totalorder 2, %s12
      // Predicated region
      $region37: #{time_distributed_3d_forward.1} parent=5 // pred_check
        %p515 = pneg %p514
      $region38: #{time_distributed_3d_forward.1} parent=5 // pred_check_branch
        %517 = sbr.rel (%p515) target = $region40
      $region39: #{time_distributed_3d_forward.1} parent=5 // pred_region
        %s518 = ssub.s32 %s12, 2
        // Predicated region
        $region41: #{time_distributed_3d_forward.1} parent=39 // pred_check
          %p519 = pneg %p109
        $region42: #{time_distributed_3d_forward.1} parent=39 // pred_check_branch
          %521 = sbr.rel (%p519) target = $region44
        $region43: #{time_distributed_3d_forward.1} parent=39 // pred_region
          %s522 = sand.u32 %s94, 1
          %s523 = scalar_lea.sflag [#allocation3], %s522
          %s524 = sand.u32 %s94, 1
          %s525 = smul.addr %s524, 192
          %s526 = scalar_lea.vmem [#allocation2], %s525
          %527 = dma.done %s523, 3072
        $region44: #{time_distributed_3d_forward.1} parent=39 // pred_fallthru
          _
      $region40: #{time_distributed_3d_forward.1} parent=5 // pred_fallthru
        _
    $region6: #{time_distributed_3d_forward.1} parent=1 // loop_footer
      %s16 = sadd.s32 1, %s12
    $region7: #{time_distributed_3d_forward.1} parent=1 // loop_footer_branch
      %11 = sbr.rel target = $region3
    $region8: #{time_distributed_3d_forward.1} parent=1 // loop_exit
      _
    %528 = vsyncpa [#allocation3], 1
    %s529 = scalar_lea.sflag [#allocation3], 1
    %530 = vsyncpa %s529, 1

</llo_original>
